<compile_context>
chip_gen: v5e
topology: v5e:2x2
jax: 0.10.0
libtpu: 0.0.40
codegen_flags: <defaults>
</compile_context>

<pallas_src>
import jax
import jax.numpy as jnp
from jax.experimental import pallas as pl
from jax.experimental.pallas import tpu as pltpu

_MiB = 1024 * 1024


def _round_up(x, m):
    return ((x + m - 1) // m) * m


def _center_intersection_kernel(x_ref, w1_ref, b1_ref, w2_ref, b2_ref, o_ref):
    # x_ref : (N, TB, Dp) embeddings tile (input dtype; bf16 feeds the MXU directly)
    # w1/w2 : (Dp, Dp)    weights, pre-transposed to (in, out) and lane-padded
    # b1/b2 : (1, Dp)     biases (lane-padded)
    # o_ref : (TB, Dp)    output tile (lane-dense: Dp % 128 == 0)
    N, TB, D = x_ref.shape
    x = x_ref[...]
    w1 = w1_ref[...]
    w2 = w2_ref[...]

    # Collapse (N, TB) into one MXU M dimension: a single (N*TB, Dp) @ (Dp, Dp)
    # matmul per layer.  TB is a multiple of 8 and Dp a multiple of 128 (wrapper
    # guarantees both), so the reshape is a layout no-op.
    x2 = x.reshape(N * TB, D)
    h = jnp.dot(x2, w1, preferred_element_type=jnp.float32) + b1_ref[...]
    h = jnp.maximum(h, 0.0)
    # Second matmul in the weights' dtype (f32 models stay f32; bf16 models feed
    # bf16 MXU inputs with f32 accumulation).
    h = h if w2.dtype == jnp.float32 else h.astype(w2.dtype)
    a = jnp.dot(h, w2, preferred_element_type=jnp.float32) + b2_ref[...]
    a = a.reshape(N, TB, D)

    # Numerically-stable softmax over the conjunct axis (axis 0), normalization
    # folded into the reduction so `attn` is never materialized:
    #   out = ( Σ_n exp(a_n - m) * x_n ) / ( Σ_n exp(a_n - m) )
    a = a - jnp.max(a, axis=0, keepdims=True)
    e = jnp.exp(a)                        # f32
    num = jnp.sum(e * x, axis=0)          # (TB, Dp), f32 accumulation
    den = jnp.sum(e, axis=0)              # (TB, Dp), f32
    # Exact divide (not pl.reciprocal(approx=True)): negligible cost, keeps the
    # output bit-close to the reference module.
    o_ref[...] = (num / den).astype(o_ref.dtype)


def _tpu_vmem_and_cores():
    """Generation-aware sizing inputs.

    v7x: 64 MiB VMEM / 2 TensorCores per chip; v5e/v6e: 128 MiB / 1 TC.
    Conservative (v7x-like) defaults if the query is unavailable."""
    vmem_cap = 64 * _MiB
    try:
        info = pltpu.get_tpu_info()
        cap = getattr(info, "vmem_capacity_bytes", None)
        if cap:
            vmem_cap = int(cap)
    except Exception:
        pass
    num_tc = 2 if vmem_cap <= 64 * _MiB else 1
    return vmem_cap, num_tc


def _pick_batch_tile(N, B, D, x_itemsize, w_itemsize, vmem_budget, num_tc):
    """Largest sublane-aligned batch tile within the VMEM budget, with an MXU
    M-fill floor (N*TB >= 512) and, on dual-TC parts only, at least num_tc
    (preferably evenly split) grid steps."""
    # Grid-invariant weight/bias footprint.  Budgeted at 2 pipeline buffers
    # (worst case: the pl.Buffered(1) request may be unsupported and fall back).
    weights_bytes = 2 * (2 * D * D + 2 * D) * w_itemsize
    # Per batch-row footprint: double-buffered x block, ~3 live f32 (N, ., D)
    # intermediates (h / a / e), f32 num+den rows, double-buffered output row.
    per_row = 2 * N * D * x_itemsize + 3 * N * D * 4 + 2 * D * 4 + 2 * D * 4
    avail = max(vmem_budget - weights_bytes, 8 * per_row)
    cap = max(8, (avail // per_row) // 8 * 8)

    b_ceil = _round_up(B, 8)
    # Fill the MXU M dimension: target N*TB >= 512 (two 256-wide MXUs on
    # v6e/v7x; also comfortably fills v5e's four 128-wide MXUs).
    m_floor = _round_up(-(-512 // N), 8)

    tb = min(cap, max(m_floor, 8), b_ceil)

    if num_tc >= 2:
        steps = -(-b_ceil // tb)
        if steps < num_tc and tb > 8:
            # Give every TensorCore at least one shard of the "parallel" axis.
            tb = max(8, _round_up(-(-b_ceil // num_tc), 8))
        else:
            # Prefer a step count that splits evenly across the TCs, as long as
            # it does not gut the MXU M fill.
            if steps > 1 and steps % num_tc != 0:
                steps_even = _round_up(steps, num_tc)
                tb_even = max(8, _round_up(-(-b_ceil // steps_even), 8))
                if N * tb_even >= 256:
                    tb = tb_even
    return tb


def _pad2(a, rows, cols):
    pr, pc = rows - a.shape[0], cols - a.shape[1]
    if pr == 0 and pc == 0:
        return a
    return jnp.pad(a, ((0, pr), (0, pc)))


def center_intersection(embeddings, w1, b1, w2, b2, *, batch_tile=None,
                        vmem_limit_bytes=None):
    """embeddings: (N, B, D); w1, w2: (D, D) in PyTorch (out, in) layout;
    b1, b2: (D,).  Returns (B, D)."""
    N, B, D = embeddings.shape
    x_itemsize = jnp.dtype(embeddings.dtype).itemsize
    w_itemsize = jnp.dtype(w1.dtype).itemsize

    vmem_cap, num_tc = _tpu_vmem_and_cores()
    if vmem_limit_bytes is None:
        # 48 MiB on v7x (64 MiB physical), 112 MiB on v5e/v6e (128 MiB physical).
        vmem_limit_bytes = max(48 * _MiB, vmem_cap - 16 * _MiB)
    vmem_budget = int(0.70 * vmem_cap)   # headroom for pipeline + compiler scratch

    # Lane-dense embedding dimension.  Zero-padding x / W / b to Dp (multiple of
    # 128) is exact: padded input lanes are 0, padded weight rows/cols and bias
    # lanes are 0, so h and the logits are 0 on padded lanes, the per-lane
    # softmax there is 1/N, and the weighted sum multiplies it by x == 0.
    D_pad = _round_up(max(D, 128), 128)

    if batch_tile is None:
        batch_tile = _pick_batch_tile(N, B, D_pad, x_itemsize, w_itemsize,
                                      vmem_budget, num_tc)
    batch_tile = max(8, _round_up(int(batch_tile), 8))
    B_pad = _round_up(B, batch_tile)

    # One-time transpose to (in, out) + zero-pad so the kernel computes x @ W
    # directly and never touches the grid-invariant weights per step.
    w1_t = _pad2(w1.T, D_pad, D_pad)
    w2_t = _pad2(w2.T, D_pad, D_pad)
    b1_2d = _pad2(b1.reshape(1, D), 1, D_pad)
    b2_2d = _pad2(b2.reshape(1, D), 1, D_pad)

    x = embeddings
    if B_pad != B or D_pad != D:
        x = jnp.pad(x, ((0, 0), (0, B_pad - B), (0, D_pad - D)))

    grid = (B_pad // batch_tile,)

    # Per grid step the x block is N strided DMA chunks of
    # batch_tile * D_pad * itemsize >= 8 * 128 * 4 = 4 KiB each (segment floor).
    def build(single_buffer_weights):
        def const_spec(shape):
            # Grid-invariant block (index_map constant): single-buffer it when
            # the jax version supports pipeline_mode=pl.Buffered(1).
            if single_buffer_weights:
                return pl.BlockSpec(shape, lambda i: (0,) * len(shape),
                                    pipeline_mode=pl.Buffered(1))
            return pl.BlockSpec(shape, lambda i: (0,) * len(shape))

        return pl.pallas_call(
            _center_intersection_kernel,
            out_shape=jax.ShapeDtypeStruct((B_pad, D_pad), embeddings.dtype),
            grid_spec=pltpu.PrefetchScalarGridSpec(
                num_scalar_prefetch=0,
                grid=grid,
                in_specs=[
                    pl.BlockSpec((N, batch_tile, D_pad), lambda i: (0, i, 0)),
                    const_spec((D_pad, D_pad)),   # w1 (in, out)
                    const_spec((1, D_pad)),       # b1
                    const_spec((D_pad, D_pad)),   # w2 (in, out)
                    const_spec((1, D_pad)),       # b2
                ],
                out_specs=pl.BlockSpec((batch_tile, D_pad), lambda i: (i, 0)),
            ),
            compiler_params=pltpu.CompilerParams(
                dimension_semantics=("parallel",),
                vmem_limit_bytes=vmem_limit_bytes,
            ),
        )

    args = (x, w1_t, b1_2d, w2_t, b2_2d)
    try:
        out = build(True)(*args)
    except Exception:
        # pipeline_mode=pl.Buffered(1) unsupported on this jax version / config:
        # fall back to default double-buffered weight blocks.
        out = build(False)(*args)

    if B_pad != B or D_pad != D:
        out = out[:B, :D]
    return out


def _xavier_uniform(key, shape):
    # nn.init.xavier_uniform_ for a (out, in) Linear weight
    fan_out, fan_in = shape
    limit = (6.0 / (fan_in + fan_out)) ** 0.5
    return jax.random.uniform(key, shape, jnp.float32, -limit, limit)


def _reference(embeddings, w1, b1, w2, b2):
    h = jax.nn.relu(jnp.einsum("nbd,ed->nbe", embeddings, w1) + b1)
    a = jax.nn.softmax(jnp.einsum("nbd,ed->nbe", h, w2) + b2, axis=0)
    return jnp.sum(a * embeddings, axis=0)


if __name__ == "__main__":
    def make_case(key, N, B, D):
        k_x, k_w1, k_b1, k_w2, k_b2 = jax.random.split(key, 5)
        x = jax.random.normal(k_x, (N, B, D), jnp.float32)
        w1 = _xavier_uniform(k_w1, (D, D))
        w2 = _xavier_uniform(k_w2, (D, D))
        # PyTorch Linear bias default: U(-1/sqrt(fan_in), 1/sqrt(fan_in))
        bound = 1.0 / (D ** 0.5)
        b1 = jax.random.uniform(k_b1, (D,), jnp.float32, -bound, bound)
        b2 = jax.random.uniform(k_b2, (D,), jnp.float32, -bound, bound)
        return x, w1, b1, w2, b2

    key = jax.random.PRNGKey(0)
    k1, k2 = jax.random.split(key)

    # Tolerance covers MXU f32 multi-pass differences between the kernel matmuls
    # and the XLA einsum reference (the approx-reciprocal error source is gone).
    TOL = dict(atol=5e-3, rtol=5e-3)

    # Case 1: small GQE-like shape; D=32 exercises the lane-dense padding path.
    x, w1, b1, w2, b2 = make_case(k1, 4, 16, 32)
    out = jax.block_until_ready(center_intersection(x, w1, b1, w2, b2))
    ref = _reference(x, w1, b1, w2, b2)
    assert out.shape == (16, 32)
    assert jnp.allclose(out, ref, **TOL), "case 1 mismatch vs reference"

    # Case 2: ragged batch (B not a multiple of 8) exercises the wrapper B-pad
    # that replaced the einsum fallback / divisibility assert.
    x, w1, b1, w2, b2 = make_case(k2, 3, 10, 32)
    out = jax.block_until_ready(center_intersection(x, w1, b1, w2, b2))
    ref = _reference(x, w1, b1, w2, b2)
    assert out.shape == (10, 32)
    assert jnp.allclose(out, ref, **TOL), "case 2 mismatch vs reference"

    print("KERNEL_OK")
</pallas_src>

<mosaic_0001>
module attributes {stable_mosaic.version = 11 : i64} {
  func.func @_center_intersection_kernel(%arg0: i32, %arg1: memref<4x8x128xf32, #tpu.memory_space<vmem>>, %arg2: memref<128x128xf32, #tpu.memory_space<vmem>>, %arg3: memref<1x128xf32, #tpu.memory_space<vmem>>, %arg4: memref<128x128xf32, #tpu.memory_space<vmem>>, %arg5: memref<1x128xf32, #tpu.memory_space<vmem>>, %arg6: memref<8x128xf32, #tpu.memory_space<vmem>>) attributes {dimension_semantics = [#tpu.dimension_semantics<parallel>], iteration_bounds = array<i64: 2>, scalar_prefetch = 0 : i64, scratch_operands = 0 : i64, tpu.core_type = #tpu.core_type<tc>, window_params = [{transform_indices = @transform_0, window_bounds = array<i64: 4, 8, 128>}, {pipeline_mode = #tpu.pipeline_mode<synchronous>, transform_indices = @transform_1, window_bounds = array<i64: 128, 128>}, {pipeline_mode = #tpu.pipeline_mode<synchronous>, transform_indices = @transform_2, window_bounds = array<i64: 1, 128>}, {pipeline_mode = #tpu.pipeline_mode<synchronous>, transform_indices = @transform_3, window_bounds = array<i64: 128, 128>}, {pipeline_mode = #tpu.pipeline_mode<synchronous>, transform_indices = @transform_4, window_bounds = array<i64: 1, 128>}, {transform_indices = @transform_5, window_bounds = array<i64: 8, 128>}]} {
    %c0 = arith.constant 0 : index
    %c0_0 = arith.constant 0 : index
    %c0_1 = arith.constant 0 : index
    %0 = vector.load %arg1[%c0, %c0_0, %c0_1] : memref<4x8x128xf32, #tpu.memory_space<vmem>>, vector<4x8x128xf32>
    %c0_2 = arith.constant 0 : index
    %c0_3 = arith.constant 0 : index
    %1 = vector.load %arg2[%c0_2, %c0_3] : memref<128x128xf32, #tpu.memory_space<vmem>>, vector<128x128xf32>
    %c0_4 = arith.constant 0 : index
    %c0_5 = arith.constant 0 : index
    %2 = vector.load %arg4[%c0_4, %c0_5] : memref<128x128xf32, #tpu.memory_space<vmem>>, vector<128x128xf32>
    %3 = vector.shape_cast %0 : vector<4x8x128xf32> to vector<32x128xf32>
    %cst = arith.constant dense<0.000000e+00> : vector<32x128xf32>
    %4 = tpu.matmul %3, %1, %cst {dimension_numbers = #tpu.dot_dimension_numbers<[1], [0], [0], [1], [0, 0, 1, 1], [], []>} : vector<32x128xf32>, vector<128x128xf32>, vector<32x128xf32> -> vector<32x128xf32>
    %c0_6 = arith.constant 0 : index
    %c0_7 = arith.constant 0 : index
    %5 = vector.load %arg3[%c0_6, %c0_7] : memref<1x128xf32, #tpu.memory_space<vmem>>, vector<1x128xf32>
    %6 = vector.broadcast %5 : vector<1x128xf32> to vector<32x128xf32>
    %7 = arith.addf %4, %6 : vector<32x128xf32>
    %cst_8 = arith.constant 0.000000e+00 : f32
    %8 = vector.broadcast %cst_8 : f32 to vector<32x128xf32>
    %9 = arith.maximumf %7, %8 : vector<32x128xf32>
    %cst_9 = arith.constant dense<0.000000e+00> : vector<32x128xf32>
    %10 = tpu.matmul %9, %2, %cst_9 {dimension_numbers = #tpu.dot_dimension_numbers<[1], [0], [0], [1], [0, 0, 1, 1], [], []>} : vector<32x128xf32>, vector<128x128xf32>, vector<32x128xf32> -> vector<32x128xf32>
    %c0_10 = arith.constant 0 : index
    %c0_11 = arith.constant 0 : index
    %11 = vector.load %arg5[%c0_10, %c0_11] : memref<1x128xf32, #tpu.memory_space<vmem>>, vector<1x128xf32>
    %12 = vector.broadcast %11 : vector<1x128xf32> to vector<32x128xf32>
    %13 = arith.addf %10, %12 : vector<32x128xf32>
    %14 = vector.shape_cast %13 : vector<32x128xf32> to vector<4x8x128xf32>
    %cst_12 = arith.constant dense<0xFF800000> : vector<8x128xf32>
    %15 = vector.multi_reduction <maximumf>, %14, %cst_12 [0] : vector<4x8x128xf32> to vector<8x128xf32>
    %16 = vector.shape_cast %15 : vector<8x128xf32> to vector<1x8x128xf32>
    %17 = vector.broadcast %16 : vector<1x8x128xf32> to vector<4x8x128xf32>
    %18 = arith.subf %14, %17 : vector<4x8x128xf32>
    %19 = math.exp %18 : vector<4x8x128xf32>
    %20 = arith.mulf %19, %0 : vector<4x8x128xf32>
    %cst_13 = arith.constant dense<0.000000e+00> : vector<8x128xf32>
    %21 = vector.multi_reduction <add>, %20, %cst_13 [0] : vector<4x8x128xf32> to vector<8x128xf32>
    %cst_14 = arith.constant dense<0.000000e+00> : vector<8x128xf32>
    %22 = vector.multi_reduction <add>, %19, %cst_14 [0] : vector<4x8x128xf32> to vector<8x128xf32>
    %23 = arith.divf %21, %22 : vector<8x128xf32>
    %c0_15 = arith.constant 0 : index
    %c0_16 = arith.constant 0 : index
    %24 = vector.load %arg6[%c0_15, %c0_16] : memref<8x128xf32, #tpu.memory_space<vmem>>, vector<8x128xf32>
    tpu.vector_store %arg6[%c0_15, %c0_16], %23 {strides = array<i32>} : memref<8x128xf32, #tpu.memory_space<vmem>>, vector<8x128xf32>,
    return
  }
  func.func @transform_0(%arg0: i32) -> (i32, i32, i32) {
    %c0_i32 = arith.constant 0 : i32
    %c0_i32_0 = arith.constant 0 : i32
    %c0_i32_1 = arith.constant 0 : i32
    return %c0_i32, %arg0, %c0_i32_0 : i32, i32, i32
  }
  func.func @transform_1(%arg0: i32) -> (i32, i32) {
    %c0_i32 = arith.constant 0 : i32
    %c0_i32_0 = arith.constant 0 : i32
    %c0_i32_1 = arith.constant 0 : i32
    return %c0_i32, %c0_i32_0 : i32, i32
  }
  func.func @transform_2(%arg0: i32) -> (i32, i32) {
    %c0_i32 = arith.constant 0 : i32
    %c0_i32_0 = arith.constant 0 : i32
    %c0_i32_1 = arith.constant 0 : i32
    return %c0_i32, %c0_i32_0 : i32, i32
  }
  func.func @transform_3(%arg0: i32) -> (i32, i32) {
    %c0_i32 = arith.constant 0 : i32
    %c0_i32_0 = arith.constant 0 : i32
    %c0_i32_1 = arith.constant 0 : i32
    return %c0_i32, %c0_i32_0 : i32, i32
  }
  func.func @transform_4(%arg0: i32) -> (i32, i32) {
    %c0_i32 = arith.constant 0 : i32
    %c0_i32_0 = arith.constant 0 : i32
    %c0_i32_1 = arith.constant 0 : i32
    return %c0_i32, %c0_i32_0 : i32, i32
  }
  func.func @transform_5(%arg0: i32) -> (i32, i32) {
    %c0_i32 = arith.constant 0 : i32
    %c0_i32_0 = arith.constant 0 : i32
    return %arg0, %c0_i32 : i32, i32
  }
}

module attributes {stable_mosaic.version = 11 : i64} {
  func.func @_center_intersection_kernel(%arg0: i32, %arg1: memref<4x8x128xf32, #tpu.memory_space<vmem>>, %arg2: memref<128x128xf32, #tpu.memory_space<vmem>>, %arg3: memref<1x128xf32, #tpu.memory_space<vmem>>, %arg4: memref<128x128xf32, #tpu.memory_space<vmem>>, %arg5: memref<1x128xf32, #tpu.memory_space<vmem>>, %arg6: memref<8x128xf32, #tpu.memory_space<vmem>>) attributes {dimension_semantics = [#tpu.dimension_semantics<parallel>], iteration_bounds = array<i64: 2>, scalar_prefetch = 0 : i64, scratch_operands = 0 : i64, tpu.core_type = #tpu.core_type<tc>, window_params = [{transform_indices = @transform_0, window_bounds = array<i64: 4, 8, 128>}, {pipeline_mode = #tpu.pipeline_mode<synchronous>, transform_indices = @transform_1, window_bounds = array<i64: 128, 128>}, {pipeline_mode = #tpu.pipeline_mode<synchronous>, transform_indices = @transform_2, window_bounds = array<i64: 1, 128>}, {pipeline_mode = #tpu.pipeline_mode<synchronous>, transform_indices = @transform_3, window_bounds = array<i64: 128, 128>}, {pipeline_mode = #tpu.pipeline_mode<synchronous>, transform_indices = @transform_4, window_bounds = array<i64: 1, 128>}, {transform_indices = @transform_5, window_bounds = array<i64: 8, 128>}]} {
    %c0 = arith.constant 0 : index
    %c0_0 = arith.constant 0 : index
    %c0_1 = arith.constant 0 : index
    %0 = vector.load %arg1[%c0, %c0_0, %c0_1] : memref<4x8x128xf32, #tpu.memory_space<vmem>>, vector<4x8x128xf32>
    %c0_2 = arith.constant 0 : index
    %c0_3 = arith.constant 0 : index
    %1 = vector.load %arg2[%c0_2, %c0_3] : memref<128x128xf32, #tpu.memory_space<vmem>>, vector<128x128xf32>
    %c0_4 = arith.constant 0 : index
    %c0_5 = arith.constant 0 : index
    %2 = vector.load %arg4[%c0_4, %c0_5] : memref<128x128xf32, #tpu.memory_space<vmem>>, vector<128x128xf32>
    %3 = vector.shape_cast %0 : vector<4x8x128xf32> to vector<32x128xf32>
    %cst = arith.constant dense<0.000000e+00> : vector<32x128xf32>
    %4 = tpu.matmul %3, %1, %cst {dimension_numbers = #tpu.dot_dimension_numbers<[1], [0], [0], [1], [0, 0, 1, 1], [], []>} : vector<32x128xf32>, vector<128x128xf32>, vector<32x128xf32> -> vector<32x128xf32>
    %c0_6 = arith.constant 0 : index
    %c0_7 = arith.constant 0 : index
    %5 = vector.load %arg3[%c0_6, %c0_7] : memref<1x128xf32, #tpu.memory_space<vmem>>, vector<1x128xf32>
    %6 = vector.broadcast %5 : vector<1x128xf32> to vector<32x128xf32>
    %7 = arith.addf %4, %6 : vector<32x128xf32>
    %cst_8 = arith.constant 0.000000e+00 : f32
    %8 = vector.broadcast %cst_8 : f32 to vector<32x128xf32>
    %9 = arith.maximumf %7, %8 : vector<32x128xf32>
    %cst_9 = arith.constant dense<0.000000e+00> : vector<32x128xf32>
    %10 = tpu.matmul %9, %2, %cst_9 {dimension_numbers = #tpu.dot_dimension_numbers<[1], [0], [0], [1], [0, 0, 1, 1], [], []>} : vector<32x128xf32>, vector<128x128xf32>, vector<32x128xf32> -> vector<32x128xf32>
    %c0_10 = arith.constant 0 : index
    %c0_11 = arith.constant 0 : index
    %11 = vector.load %arg5[%c0_10, %c0_11] : memref<1x128xf32, #tpu.memory_space<vmem>>, vector<1x128xf32>
    %12 = vector.broadcast %11 : vector<1x128xf32> to vector<32x128xf32>
    %13 = arith.addf %10, %12 : vector<32x128xf32>
    %14 = vector.shape_cast %13 : vector<32x128xf32> to vector<4x8x128xf32>
    %cst_12 = arith.constant dense<0xFF800000> : vector<8x128xf32>
    %15 = vector.multi_reduction <maximumf>, %14, %cst_12 [0] : vector<4x8x128xf32> to vector<8x128xf32>
    %16 = vector.shape_cast %15 : vector<8x128xf32> to vector<1x8x128xf32>
    %17 = vector.broadcast %16 : vector<1x8x128xf32> to vector<4x8x128xf32>
    %18 = arith.subf %14, %17 : vector<4x8x128xf32>
    %19 = math.exp %18 : vector<4x8x128xf32>
    %20 = arith.mulf %19, %0 : vector<4x8x128xf32>
    %cst_13 = arith.constant dense<0.000000e+00> : vector<8x128xf32>
    %21 = vector.multi_reduction <add>, %20, %cst_13 [0] : vector<4x8x128xf32> to vector<8x128xf32>
    %cst_14 = arith.constant dense<0.000000e+00> : vector<8x128xf32>
    %22 = vector.multi_reduction <add>, %19, %cst_14 [0] : vector<4x8x128xf32> to vector<8x128xf32>
    %23 = arith.divf %21, %22 : vector<8x128xf32>
    %c0_15 = arith.constant 0 : index
    %c0_16 = arith.constant 0 : index
    %24 = vector.load %arg6[%c0_15, %c0_16] : memref<8x128xf32, #tpu.memory_space<vmem>>, vector<8x128xf32>
    tpu.vector_store %arg6[%c0_15, %c0_16], %23 {strides = array<i32>} : memref<8x128xf32, #tpu.memory_space<vmem>>, vector<8x128xf32>,
    return
  }
  func.func @transform_0(%arg0: i32) -> (i32, i32, i32) {
    %c0_i32 = arith.constant 0 : i32
    %c0_i32_0 = arith.constant 0 : i32
    %c0_i32_1 = arith.constant 0 : i32
    return %c0_i32, %arg0, %c0_i32_0 : i32, i32, i32
  }
  func.func @transform_1(%arg0: i32) -> (i32, i32) {
    %c0_i32 = arith.constant 0 : i32
    %c0_i32_0 = arith.constant 0 : i32
    %c0_i32_1 = arith.constant 0 : i32
    return %c0_i32, %c0_i32_0 : i32, i32
  }
  func.func @transform_2(%arg0: i32) -> (i32, i32) {
    %c0_i32 = arith.constant 0 : i32
    %c0_i32_0 = arith.constant 0 : i32
    %c0_i32_1 = arith.constant 0 : i32
    return %c0_i32, %c0_i32_0 : i32, i32
  }
  func.func @transform_3(%arg0: i32) -> (i32, i32) {
    %c0_i32 = arith.constant 0 : i32
    %c0_i32_0 = arith.constant 0 : i32
    %c0_i32_1 = arith.constant 0 : i32
    return %c0_i32, %c0_i32_0 : i32, i32
  }
  func.func @transform_4(%arg0: i32) -> (i32, i32) {
    %c0_i32 = arith.constant 0 : i32
    %c0_i32_0 = arith.constant 0 : i32
    %c0_i32_1 = arith.constant 0 : i32
    return %c0_i32, %c0_i32_0 : i32, i32
  }
  func.func @transform_5(%arg0: i32) -> (i32, i32) {
    %c0_i32 = arith.constant 0 : i32
    %c0_i32_0 = arith.constant 0 : i32
    return %arg0, %c0_i32 : i32, i32
  }
}

</mosaic_0001>

<llo_original>
// kernel: tpu_custom_call.1
$region0: #{tpu_custom_call.1}
  #allocation0 [shape = 'u32[]', space=smem, size = 0x4, offset = 0x4, fixed_abs, tag = 'smem constant byte address 0x4 - core index']
  #allocation1 [shape = 'u32[72,128]{1,0:T(1,128)}', space=vmem, size = 0x9000, scoped, tag = 'internal scratch']
  %s0 = inlined_call_operand.hbm [shape: f32[4,16,128], index: 0, kind: input, shape index: {}]
  %s1 = inlined_call_operand.hbm [shape: f32[128,128], index: 1, kind: input, shape index: {}]
  %s2 = inlined_call_operand.vmem [shape: f32[1,128], index: 2, kind: input, shape index: {}]
  %s3 = inlined_call_operand.hbm [shape: f32[128,128], index: 3, kind: input, shape index: {}]
  %s4 = inlined_call_operand.vmem [shape: f32[1,128], index: 4, kind: input, shape index: {}]
  %s5 = inlined_call_operand.hbm [shape: f32[16,128], index: 5, kind: output, shape index: {}]
  %s6 = sld [smem:[#allocation0]]
  $region65: #{tpu_custom_call.1} parent=0
    _
  %s8 = ssub.s32 1, %s6
  %s9 = scalar_select 0, %s8, %s6
  $region1: #{tpu_custom_call.1} parent=0
    #allocation2 [shape = 'u8[32768]{0}', space=vmem, size = 0x8000, scoped, tag = 'input window, operand 0']
    #allocation3 [shape = 's32[2]{0}', space=sflag, size = 0x8, scoped, tag = 'scoped memory for tpu_custom_call.1']
    #allocation4 [shape = 's32[2]{0}', space=sflag, size = 0x8, scoped, tag = 'scoped memory for tpu_custom_call.1']
    #allocation5 [shape = 'u8[65536]{0}', space=vmem, size = 0x10000, scoped, tag = 'input window, operand 1, single buffered']
    #allocation6 [shape = 's32[1]{0}', space=sflag, size = 0x4, scoped, tag = 'scoped memory for tpu_custom_call.1']
    #allocation7 [shape = 'u8[65536]{0}', space=vmem, size = 0x10000, scoped, tag = 'input window, operand 3, single buffered']
    #allocation8 [shape = 'u8[8192]{0}', space=vmem, size = 0x2000, scoped, tag = 'output window, operand 0']
    %10 = vsyncpa [#allocation3], 0
    %s11 = scalar_lea.sflag [#allocation3], 1
    %12 = vsyncpa %s11, 0
    %13 = vsyncpa [#allocation6], 0
    %14 = vsyncpa [#allocation4], 0
    %s15 = scalar_lea.sflag [#allocation4], 1
    %16 = vsyncpa %s15, 0
    loop: start=0, step=1, limit=4
    $region2: #{tpu_custom_call.1} parent=1 // loop_pre_header
      _
    $region3: #{tpu_custom_call.1} parent=1 // loop_header
      %s18 = sphi 0, %s22
      %p19 = scmp.ge.s32.totalorder %s18, 4
      %s28 = sphi 0, %s30
      %s31 = sphi 0, %s28
      %s32 = sphi 0, %s31
      %s48 = sphi 0, %s32
      %s52 = sphi 0, %s52
      %s54 = sphi 0, %s52
      %s55 = sphi 0, %s54
      %s69 = sphi 0, %s55
      %s73 = sphi 0, %s73
      %s75 = sphi 0, %s73
      %s76 = sphi 0, %s75
      %s90 = sphi 0, %s76
      %s94 = sphi 0, %s94
      %s96 = sphi 0, %s94
      %s97 = sphi 0, %s96
      %s111 = sphi 0, %s97
      %s115 = sphi 0, %s115
      %s117 = sphi 0, %s115
      %s118 = sphi 0, %s117
      %s132 = sphi 0, %s118
      %s138 = sphi 0, %s140
      %s141 = sphi 0, %s138
      %s142 = sphi 0, %s141
      %s158 = sphi 0, %s142
    $region4: #{tpu_custom_call.1} parent=1 // loop_header_branch
      %21 = sbr.rel (%p19) target = $region8
    $region5: #{tpu_custom_call.1} parent=1 // loop_body
      %s23 = ssub.s32 %s18, 1
      %s24 = ssub.s32 %s18, 2
      %s25 = sadd.s32 %s18, 1
      %s26 = ssub.s32 %s18, %s25
      %p27 = scmp.eq.s32.totalorder %s26, 0
      %s29 = sadd.s32 %s28, 1
      %s30 = scalar_select %p27, %s28, %s29
      %p33 = pneg %p27
      %p34 = scmp.eq.s32.totalorder %s18, 1
      %p35 = por %p33, %p34
      %p36 = scmp.ne.s32.totalorder %s28, %s31
      %p37 = scmp.eq.s32.totalorder %s18, 0
      %p38 = por %p36, %p37
      %p39 = scmp.ne.s32.totalorder %s28, %s31
      %p40 = scmp.eq.s32.totalorder %s23, 1
      %p41 = por %p39, %p40
      %p42 = scmp.ne.s32.totalorder %s31, %s32
      %p43 = scmp.eq.s32.totalorder %s23, 0
      %p44 = por %p42, %p43
      %p45 = scmp.ne.s32.totalorder %s31, %s32
      %p46 = scmp.eq.s32.totalorder %s24, 1
      %p47 = por %p45, %p46
      %p49 = scmp.ne.s32.totalorder %s32, %s48
      %p50 = scmp.eq.s32.totalorder %s24, 0
      %p51 = por %p49, %p50
      %s53 = sadd.s32 %s52, 1
      %p56 = scmp.eq.s32.totalorder %s18, 1
      %p57 = scmp.ne.s32.totalorder %s52, %s54
      %p58 = scmp.eq.s32.totalorder %s18, 0
      %p59 = por %p57, %p58
      %p60 = scmp.ne.s32.totalorder %s52, %s54
      %p61 = scmp.eq.s32.totalorder %s23, 1
      %p62 = por %p60, %p61
      %p63 = scmp.ne.s32.totalorder %s54, %s55
      %p64 = scmp.eq.s32.totalorder %s23, 0
      %p65 = por %p63, %p64
      %p66 = scmp.ne.s32.totalorder %s54, %s55
      %p67 = scmp.eq.s32.totalorder %s24, 1
      %p68 = por %p66, %p67
      %p70 = scmp.ne.s32.totalorder %s55, %s69
      %p71 = scmp.eq.s32.totalorder %s24, 0
      %p72 = por %p70, %p71
      %s74 = sadd.s32 %s73, 1
      %p77 = scmp.eq.s32.totalorder %s18, 1
      %p78 = scmp.ne.s32.totalorder %s73, %s75
      %p79 = scmp.eq.s32.totalorder %s18, 0
      %p80 = por %p78, %p79
      %p81 = scmp.ne.s32.totalorder %s73, %s75
      %p82 = scmp.eq.s32.totalorder %s23, 1
      %p83 = por %p81, %p82
      %p84 = scmp.ne.s32.totalorder %s75, %s76
      %p85 = scmp.eq.s32.totalorder %s23, 0
      %p86 = por %p84, %p85
      %p87 = scmp.ne.s32.totalorder %s75, %s76
      %p88 = scmp.eq.s32.totalorder %s24, 1
      %p89 = por %p87, %p88
      %p91 = scmp.ne.s32.totalorder %s76, %s90
      %p92 = scmp.eq.s32.totalorder %s24, 0
      %p93 = por %p91, %p92
      %s95 = sadd.s32 %s94, 1
      %p98 = scmp.eq.s32.totalorder %s18, 1
      %p99 = scmp.ne.s32.totalorder %s94, %s96
      %p100 = scmp.eq.s32.totalorder %s18, 0
      %p101 = por %p99, %p100
      %p102 = scmp.ne.s32.totalorder %s94, %s96
      %p103 = scmp.eq.s32.totalorder %s23, 1
      %p104 = por %p102, %p103
      %p105 = scmp.ne.s32.totalorder %s96, %s97
      %p106 = scmp.eq.s32.totalorder %s23, 0
      %p107 = por %p105, %p106
      %p108 = scmp.ne.s32.totalorder %s96, %s97
      %p109 = scmp.eq.s32.totalorder %s24, 1
      %p110 = por %p108, %p109
      %p112 = scmp.ne.s32.totalorder %s97, %s111
      %p113 = scmp.eq.s32.totalorder %s24, 0
      %p114 = por %p112, %p113
      %s116 = sadd.s32 %s115, 1
      %p119 = scmp.eq.s32.totalorder %s18, 1
      %p120 = scmp.ne.s32.totalorder %s115, %s117
      %p121 = scmp.eq.s32.totalorder %s18, 0
      %p122 = por %p120, %p121
      %p123 = scmp.ne.s32.totalorder %s115, %s117
      %p124 = scmp.eq.s32.totalorder %s23, 1
      %p125 = por %p123, %p124
      %p126 = scmp.ne.s32.totalorder %s117, %s118
      %p127 = scmp.eq.s32.totalorder %s23, 0
      %p128 = por %p126, %p127
      %p129 = scmp.ne.s32.totalorder %s117, %s118
      %p130 = scmp.eq.s32.totalorder %s24, 1
      %p131 = por %p129, %p130
      %p133 = scmp.ne.s32.totalorder %s118, %s132
      %p134 = scmp.eq.s32.totalorder %s24, 0
      %p135 = por %p133, %p134
      %s136 = ssub.s32 %s18, %s25
      %p137 = scmp.eq.s32.totalorder %s136, 0
      %s139 = sadd.s32 %s138, 1
      %s140 = scalar_select %p137, %s138, %s139
      %p143 = pneg %p137
      %p144 = scmp.eq.s32.totalorder %s18, 1
      %p145 = por %p143, %p144
      %p146 = scmp.ne.s32.totalorder %s138, %s141
      %p147 = scmp.eq.s32.totalorder %s18, 0
      %p148 = por %p146, %p147
      %p149 = scmp.ne.s32.totalorder %s138, %s141
      %p150 = scmp.eq.s32.totalorder %s23, 1
      %p151 = por %p149, %p150
      %p152 = scmp.ne.s32.totalorder %s141, %s142
      %p153 = scmp.eq.s32.totalorder %s23, 0
      %p154 = por %p152, %p153
      %p155 = scmp.ne.s32.totalorder %s141, %s142
      %p156 = scmp.eq.s32.totalorder %s24, 1
      %p157 = por %p155, %p156
      %p159 = scmp.ne.s32.totalorder %s142, %s158
      %p160 = scmp.eq.s32.totalorder %s24, 0
      %p161 = por %p159, %p160
      %p162 = scmp.le.s32.totalorder 1, %s18
      %p163 = scmp.lt.s32.totalorder %s18, 3
      %p164 = pnand %p162, %p163
      %p165 = pneg %p164
      // Predicated region
      $region9: #{tpu_custom_call.1} parent=5 // pred_check
        _
      $region10: #{tpu_custom_call.1} parent=5 // pred_check_branch
        %167 = sbr.rel (%p164) target = $region12
      $region11: #{tpu_custom_call.1} parent=5 // pred_region
        %s168 = ssub.s32 %s18, 1
        // Predicated region
        $region13: #{tpu_custom_call.1} parent=11 // pred_check
          %p169 = pneg %p65
        $region14: #{tpu_custom_call.1} parent=11 // pred_check_branch
          %171 = sbr.rel (%p169) target = $region16
        $region15: #{tpu_custom_call.1} parent=11 // pred_region
          %173 = vsyncadd [#allocation6], 0
          %s174 = sshll.u32 %s1, 4
          %s175 = int_to_ptr.hbm [resolvable:$true] %s174
          %s176 = sshll.u32 [#allocation5], 4
          %s177 = int_to_ptr.vmem [resolvable:$true] %s176
          %182 = dma.hbm_to_vmem [thread:$0]  %s175, 2048, %s177, [#allocation6], 128, 128, 8
        $region16: #{tpu_custom_call.1} parent=11 // pred_fallthru
          _
        // Predicated region
        $region17: #{tpu_custom_call.1} parent=11 // pred_check
          %p183 = pneg %p86
        $region18: #{tpu_custom_call.1} parent=11 // pred_check_branch
          %185 = sbr.rel (%p183) target = $region20
        $region19: #{tpu_custom_call.1} parent=11 // pred_region
          _
        $region20: #{tpu_custom_call.1} parent=11 // pred_fallthru
          _
        // Predicated region
        $region21: #{tpu_custom_call.1} parent=11 // pred_check
          %p186 = pneg %p107
        $region22: #{tpu_custom_call.1} parent=11 // pred_check_branch
          %188 = sbr.rel (%p186) target = $region24
        $region23: #{tpu_custom_call.1} parent=11 // pred_region
          %190 = vsyncadd [#allocation6], 0
          %s191 = sshll.u32 %s3, 4
          %s192 = int_to_ptr.hbm [resolvable:$true] %s191
          %s193 = sshll.u32 [#allocation7], 4
          %s194 = int_to_ptr.vmem [resolvable:$true] %s193
          %199 = dma.hbm_to_vmem [thread:$0]  %s192, 2048, %s194, [#allocation6], 128, 128, 8
        $region24: #{tpu_custom_call.1} parent=11 // pred_fallthru
          _
        // Predicated region
        $region25: #{tpu_custom_call.1} parent=11 // pred_check
          %p200 = pneg %p128
        $region26: #{tpu_custom_call.1} parent=11 // pred_check_branch
          %202 = sbr.rel (%p200) target = $region28
        $region27: #{tpu_custom_call.1} parent=11 // pred_region
          _
        $region28: #{tpu_custom_call.1} parent=11 // pred_fallthru
          _
      $region12: #{tpu_custom_call.1} parent=5 // pred_fallthru
        _
      %p203 = scmp.lt.s32.totalorder %s18, 2
      // Predicated region
      $region29: #{tpu_custom_call.1} parent=5 // pred_check
        %p204 = pneg %p203
      $region30: #{tpu_custom_call.1} parent=5 // pred_check_branch
        %206 = sbr.rel (%p204) target = $region32
      $region31: #{tpu_custom_call.1} parent=5 // pred_region
        // Predicated region
        $region33: #{tpu_custom_call.1} parent=31 // pred_check
          %p207 = pneg %p38
        $region34: #{tpu_custom_call.1} parent=31 // pred_check_branch
          %209 = sbr.rel (%p207) target = $region36
        $region35: #{tpu_custom_call.1} parent=31 // pred_region
          %s210 = sand.u32 %s28, 1
          %s211 = scalar_lea.sflag [#allocation3], %s210
          %s212 = sand.u32 %s28, 1
          %s213 = smul.addr %s212, 32
          %s214 = scalar_lea.vmem [#allocation2], %s213
          %216 = vsyncadd %s211, 0
          %s217 = smul.addr %s18, 8
          %s218 = scalar_lea.hbm %s0, %s217
          %s219 = sshll.u32 %s218, 4
          %s220 = int_to_ptr.hbm [resolvable:$true] %s219
          %s221 = sshll.u32 %s214, 4
          %s222 = int_to_ptr.vmem [resolvable:$true] %s221
          %227 = dma.hbm_to_vmem [thread:$0]  %s220, 512, %s222, %s211, 256, 128, 8
        $region36: #{tpu_custom_call.1} parent=31 // pred_fallthru
          _
      $region32: #{tpu_custom_call.1} parent=5 // pred_fallthru
        _
      %p228 = scmp.le.s32.totalorder 1, %s18
      %p229 = scmp.lt.s32.totalorder %s18, 3
      %p230 = pnand %p228, %p229
      %p231 = pneg %p230
      // Predicated region
      $region37: #{tpu_custom_call.1} parent=5 // pred_check
        _
      $region38: #{tpu_custom_call.1} parent=5 // pred_check_branch
        %233 = sbr.rel (%p230) target = $region40
      $region39: #{tpu_custom_call.1} parent=5 // pred_region
        %s234 = ssub.s32 %s18, 1
        %s235 = sand.u32 %s31, 1
        %s236 = scalar_lea.sflag [#allocation3], %s235
        %s237 = sand.u32 %s31, 1
        %s238 = smul.addr %s237, 32
        %s239 = scalar_lea.vmem [#allocation2], %s238
        // Predicated region
        $region41: #{tpu_custom_call.1} parent=39 // pred_check
          %p240 = pneg %p44
        $region42: #{tpu_custom_call.1} parent=39 // pred_check_branch
          %242 = sbr.rel (%p240) target = $region44
        $region43: #{tpu_custom_call.1} parent=39 // pred_region
          %244 = dma.done %s236, 512
        $region44: #{tpu_custom_call.1} parent=39 // pred_fallthru
          _
        // Predicated region
        $region45: #{tpu_custom_call.1} parent=39 // pred_check
          %p245 = pneg %p65
        $region46: #{tpu_custom_call.1} parent=39 // pred_check_branch
          %247 = sbr.rel (%p245) target = $region48
        $region47: #{tpu_custom_call.1} parent=39 // pred_region
          %249 = dma.done [#allocation6], 2048
        $region48: #{tpu_custom_call.1} parent=39 // pred_fallthru
          _
        // Predicated region
        $region49: #{tpu_custom_call.1} parent=39 // pred_check
          %p250 = pneg %p107
        $region50: #{tpu_custom_call.1} parent=39 // pred_check_branch
          %252 = sbr.rel (%p250) target = $region52
        $region51: #{tpu_custom_call.1} parent=39 // pred_region
          %254 = dma.done [#allocation6], 2048
        $region52: #{tpu_custom_call.1} parent=39 // pred_fallthru
          _
        %s255 = sand.u32 %s31, 1
        %s256 = scalar_lea.sflag [#allocation3], %s255
        %s257 = sand.u32 %s31, 1
        %s258 = smul.addr %s257, 32
        %s259 = scalar_lea.vmem [#allocation2], %s258
        %p260 = pneg %p44
        %p261 = pneg %p41
        %p262 = pneg %p65
        %p263 = pneg %p62
        %p264 = pneg %p86
        %p265 = pneg %p83
        %p266 = pneg %p107
        %p267 = pneg %p104
        %p268 = pneg %p128
        %p269 = pneg %p125
        %p270 = pneg %p154
        %p271 = pneg %p151
        %s272 = sand.u32 %s141, 1
        %s273 = scalar_lea.sflag [#allocation4], %s272
        %s274 = sand.u32 %s141, 1
        %s275 = smul.addr %s274, 8
        %s276 = scalar_lea.vmem [#allocation8], %s275
        %v277 = vld [vmem:[%s239] sm:$0xff]
        %v278 = vld [vmem:[%s239 + $0x8] sm:$0xff]
        %v279 = vld [vmem:[%s239 + $0x10] sm:$0xff]
        %v280 = vld [vmem:[%s239 + $0x18] sm:$0xff]
        %v281 = vld [vmem:[#allocation5] sm:$0xff]
        %v282 = vld [vmem:[#allocation5 + $0x8] sm:$0xff]
        %v283 = vld [vmem:[#allocation5 + $0x10] sm:$0xff]
        %v284 = vld [vmem:[#allocation5 + $0x18] sm:$0xff]
        %v285 = vld [vmem:[#allocation5 + $0x20] sm:$0xff]
        %v286 = vld [vmem:[#allocation5 + $0x28] sm:$0xff]
        %v287 = vld [vmem:[#allocation5 + $0x30] sm:$0xff]
        %v288 = vld [vmem:[#allocation5 + $0x38] sm:$0xff]
        %v289 = vld [vmem:[#allocation5 + $0x40] sm:$0xff]
        %v290 = vld [vmem:[#allocation5 + $0x48] sm:$0xff]
        %v291 = vld [vmem:[#allocation5 + $0x50] sm:$0xff]
        %v292 = vld [vmem:[#allocation5 + $0x58] sm:$0xff]
        %v293 = vld [vmem:[#allocation5 + $0x60] sm:$0xff]
        %v294 = vld [vmem:[#allocation5 + $0x68] sm:$0xff]
        %v295 = vld [vmem:[#allocation5 + $0x70] sm:$0xff]
        %v296 = vld [vmem:[#allocation5 + $0x78] sm:$0xff]
        %v297 = vld [vmem:[#allocation7] sm:$0xff]
        %v298 = vld [vmem:[#allocation7 + $0x8] sm:$0xff]
        %v299 = vld [vmem:[#allocation7 + $0x10] sm:$0xff]
        %v300 = vld [vmem:[#allocation7 + $0x18] sm:$0xff]
        %v301 = vld [vmem:[#allocation7 + $0x20] sm:$0xff]
        %v302 = vld [vmem:[#allocation7 + $0x28] sm:$0xff]
        %v303 = vld [vmem:[#allocation7 + $0x30] sm:$0xff]
        %v304 = vld [vmem:[#allocation7 + $0x38] sm:$0xff]
        %v305 = vld [vmem:[#allocation7 + $0x40] sm:$0xff]
        %v306 = vld [vmem:[#allocation7 + $0x48] sm:$0xff]
        %v307 = vld [vmem:[#allocation7 + $0x50] sm:$0xff]
        %v308 = vld [vmem:[#allocation7 + $0x58] sm:$0xff]
        %v309 = vld [vmem:[#allocation7 + $0x60] sm:$0xff]
        %v310 = vld [vmem:[#allocation7 + $0x68] sm:$0xff]
        %v311 = vld [vmem:[#allocation7 + $0x70] sm:$0xff]
        %v312 = vld [vmem:[#allocation7 + $0x78] sm:$0xff]
        %v313 = vld [vmem:[%s2] sm:$0x1]
        %v315 = vperm.slane %v313, 0
        %317 = vmatpush.msra.mxu0 %v296
        %318 = vmatpush.msra.mxu0 %v295
        %319 = vmatpush.msra.mxu0 %v294
        %320 = vmatpush.msra.mxu0 %v293
        %321 = vmatpush.msra.mxu0 %v292
        %322 = vmatpush.msra.mxu0 %v291
        %323 = vmatpush.msra.mxu0 %v290
        %324 = vmatpush.msra.mxu0 %v289
        %325 = vmatpush.msra.mxu0 %v288
        %326 = vmatpush.msra.mxu0 %v287
        %327 = vmatpush.msra.mxu0 %v286
        %328 = vmatpush.msra.mxu0 %v285
        %329 = vmatpush.msra.mxu0 %v284
        %330 = vmatpush.msra.mxu0 %v283
        %331 = vmatpush.msra.mxu0 %v282
        %332 = vmatpush.msra.mxu0 %v281
        %333 = vmatmul.f32.gmra.mxu0 %v277
        %v334 = vpop.f32.mrf.mxu0
        %v335 = vadd.f32 %v315, %v334
        %336 = vmatmul.f32.gmra.mxu0 %v278
        %v337 = vpop.f32.mrf.mxu0
        %v338 = vadd.f32 %v315, %v337
        %339 = vmatmul.f32.gmra.mxu0 %v279
        %v340 = vpop.f32.mrf.mxu0
        %v341 = vadd.f32 %v315, %v340
        %342 = vmatmul.f32.gmra.mxu0 %v280
        %v343 = vpop.f32.mrf.mxu0
        %v344 = vadd.f32 %v315, %v343
        %345 = vdwg.mxu0
        %v346 = vmax.f32 %v335, 0.0
        %v347 = vmax.f32 %v338, 0.0
        %v348 = vmax.f32 %v341, 0.0
        %v349 = vmax.f32 %v344, 0.0
        %v350 = vld [vmem:[%s4] sm:$0x1]
        %v352 = vperm.slane %v350, 0
        %354 = vmatpush.msra.mxu0 %v312
        %355 = vmatpush.msra.mxu0 %v311
        %356 = vmatpush.msra.mxu0 %v310
        %357 = vmatpush.msra.mxu0 %v309
        %358 = vmatpush.msra.mxu0 %v308
        %359 = vmatpush.msra.mxu0 %v307
        %360 = vmatpush.msra.mxu0 %v306
        %361 = vmatpush.msra.mxu0 %v305
        %362 = vmatpush.msra.mxu0 %v304
        %363 = vmatpush.msra.mxu0 %v303
        %364 = vmatpush.msra.mxu0 %v302
        %365 = vmatpush.msra.mxu0 %v301
        %366 = vmatpush.msra.mxu0 %v300
        %367 = vmatpush.msra.mxu0 %v299
        %368 = vmatpush.msra.mxu0 %v298
        %369 = vmatpush.msra.mxu0 %v297
        %370 = vmatmul.f32.gmra.mxu0 %v346
        %v371 = vpop.f32.mrf.mxu0
        %v372 = vadd.f32 %v352, %v371
        %373 = vmatmul.f32.gmra.mxu0 %v347
        %v374 = vpop.f32.mrf.mxu0
        %v375 = vadd.f32 %v352, %v374
        %376 = vmatmul.f32.gmra.mxu0 %v348
        %v377 = vpop.f32.mrf.mxu0
        %v378 = vadd.f32 %v352, %v377
        %379 = vmatmul.f32.gmra.mxu0 %v349
        %v380 = vpop.f32.mrf.mxu0
        %v381 = vadd.f32 %v352, %v380
        %382 = vdwg.mxu0
        %v383 = vmax.f32 %v372, %v375
        %v384 = vmax.f32 %v378, %v381
        %v385 = vmax.f32 %v383, %v384
        %v386 = vsub.f32 %v372, %v385
        %v387 = vsub.f32 %v375, %v385
        %v388 = vsub.f32 %v378, %v385
        %v389 = vsub.f32 %v381, %v385
        %v390 = vmul.f32 %v386, 1.442695
        %v391 = vpow.pop %v390
        %v392 = vmul.f32 %v387, 1.442695
        %v393 = vpow.pop %v392
        %v394 = vmul.f32 %v388, 1.442695
        %v395 = vpow.pop %v394
        %v396 = vmul.f32 %v389, 1.442695
        %v397 = vpow.pop %v396
        %v398 = vmul.f32 %v391, %v277
        %v399 = vmul.f32 %v393, %v278
        %v400 = vmul.f32 %v395, %v279
        %v401 = vmul.f32 %v397, %v280
        %v402 = vadd.f32 %v398, %v399
        %v403 = vadd.f32 %v402, %v400
        %v404 = vadd.f32 %v403, %v401
        %v405 = vadd.f32 %v391, %v393
        %v406 = vadd.f32 %v405, %v395
        %v407 = vadd.f32 %v406, %v397
        %v408 = vrcp.pop %v407
        %v409 = vmul.f32 %v407, %v408
        %v410 = vsub.f32 1.0, %v409
        %v411 = vmul.f32 %v408, %v410
        %v412 = vadd.f32 %v408, %v411
        %vm413 = vweird.f32 %v407
        %vm414 = vweird.f32 %v408
        %vm415 = vmor %vm413, %vm414
        %v416 = vsel %vm415, %v408, %v412
        %v417 = vand.u32 2147483647, %v407
        %vm418 = vcmp.eq.f32.partialorder %v417, 8.507059e+37
        %v419 = vand.u32 %v407, 2147483648
        %v420 = vor.u32 1.1754944e-38, %v419
        %v421 = vsel %vm418, %v420, %v416
        %v422 = vmul.f32 %v404, %v421
        %423 = vst [vmem:[%s276] sm:$0xff] %v422
        %s424 = sand.u32 %s141, 1
        %s425 = scalar_lea.sflag [#allocation4], %s424
        %s426 = sand.u32 %s141, 1
        %s427 = smul.addr %s426, 8
        %s428 = scalar_lea.vmem [#allocation8], %s427
        // Predicated region
        $region53: #{tpu_custom_call.1} parent=39 // pred_check
          %p429 = pneg %p151
        $region54: #{tpu_custom_call.1} parent=39 // pred_check_branch
          %431 = sbr.rel (%p429) target = $region56
        $region55: #{tpu_custom_call.1} parent=39 // pred_region
          %433 = vsyncadd %s425, 0
          %s434 = smul.addr %s23, 8
          %s435 = scalar_lea.hbm %s5, %s434
          %s437 = sshll.u32 %s428, 4
          %s438 = int_to_ptr.vmem [resolvable:$true] %s437
          %s439 = sshll.u32 %s435, 4
          %s440 = int_to_ptr.hbm [resolvable:$true] %s439
          %442 = dma.vmem_to_hbm [thread:$0]  %s438, 128, %s440, %s425
        $region56: #{tpu_custom_call.1} parent=39 // pred_fallthru
          _
      $region40: #{tpu_custom_call.1} parent=5 // pred_fallthru
        _
      %p443 = scmp.le.s32.totalorder 2, %s18
      // Predicated region
      $region57: #{tpu_custom_call.1} parent=5 // pred_check
        %p444 = pneg %p443
      $region58: #{tpu_custom_call.1} parent=5 // pred_check_branch
        %446 = sbr.rel (%p444) target = $region60
      $region59: #{tpu_custom_call.1} parent=5 // pred_region
        %s447 = ssub.s32 %s18, 2
        // Predicated region
        $region61: #{tpu_custom_call.1} parent=59 // pred_check
          %p448 = pneg %p157
        $region62: #{tpu_custom_call.1} parent=59 // pred_check_branch
          %450 = sbr.rel (%p448) target = $region64
        $region63: #{tpu_custom_call.1} parent=59 // pred_region
          %s451 = sand.u32 %s142, 1
          %s452 = scalar_lea.sflag [#allocation4], %s451
          %s453 = sand.u32 %s142, 1
          %s454 = smul.addr %s453, 8
          %s455 = scalar_lea.vmem [#allocation8], %s454
          %457 = dma.done %s452, 128
        $region64: #{tpu_custom_call.1} parent=59 // pred_fallthru
          _
      $region60: #{tpu_custom_call.1} parent=5 // pred_fallthru
        _
    $region6: #{tpu_custom_call.1} parent=1 // loop_footer
      %s22 = sadd.s32 1, %s18
    $region7: #{tpu_custom_call.1} parent=1 // loop_footer_branch
      %17 = sbr.rel target = $region3
    $region8: #{tpu_custom_call.1} parent=1 // loop_exit
      _
    %458 = vsyncpa [#allocation3], 1
    %s459 = scalar_lea.sflag [#allocation3], 1
    %460 = vsyncpa %s459, 1
    %461 = vsyncpa [#allocation6], 1
    %462 = vsyncpa [#allocation4], 1
    %s463 = scalar_lea.sflag [#allocation4], 1
    %464 = vsyncpa %s463, 1

// kernel: tpu_custom_call.1
$region0: #{tpu_custom_call.1}
  #allocation0 [shape = 'u32[]', space=smem, size = 0x4, offset = 0x4, fixed_abs, tag = 'smem constant byte address 0x4 - core index']
  #allocation1 [shape = 'u32[72,128]{1,0:T(1,128)}', space=vmem, size = 0x9000, scoped, tag = 'internal scratch']
  %s0 = inlined_call_operand.hbm [shape: f32[4,16,128], index: 0, kind: input, shape index: {}]
  %s1 = inlined_call_operand.hbm [shape: f32[128,128], index: 1, kind: input, shape index: {}]
  %s2 = inlined_call_operand.vmem [shape: f32[1,128], index: 2, kind: input, shape index: {}]
  %s3 = inlined_call_operand.hbm [shape: f32[128,128], index: 3, kind: input, shape index: {}]
  %s4 = inlined_call_operand.vmem [shape: f32[1,128], index: 4, kind: input, shape index: {}]
  %s5 = inlined_call_operand.hbm [shape: f32[16,128], index: 5, kind: output, shape index: {}]
  %s6 = sld [smem:[#allocation0]]
  $region65: #{tpu_custom_call.1} parent=0
    _
  %s8 = ssub.s32 1, %s6
  %s9 = scalar_select 0, %s8, %s6
  $region1: #{tpu_custom_call.1} parent=0
    #allocation2 [shape = 'u8[32768]{0}', space=vmem, size = 0x8000, scoped, tag = 'input window, operand 0']
    #allocation3 [shape = 's32[2]{0}', space=sflag, size = 0x8, scoped, tag = 'scoped memory for tpu_custom_call.1']
    #allocation4 [shape = 's32[2]{0}', space=sflag, size = 0x8, scoped, tag = 'scoped memory for tpu_custom_call.1']
    #allocation5 [shape = 'u8[65536]{0}', space=vmem, size = 0x10000, scoped, tag = 'input window, operand 1, single buffered']
    #allocation6 [shape = 's32[1]{0}', space=sflag, size = 0x4, scoped, tag = 'scoped memory for tpu_custom_call.1']
    #allocation7 [shape = 'u8[65536]{0}', space=vmem, size = 0x10000, scoped, tag = 'input window, operand 3, single buffered']
    #allocation8 [shape = 'u8[8192]{0}', space=vmem, size = 0x2000, scoped, tag = 'output window, operand 0']
    %10 = vsyncpa [#allocation3], 0
    %s11 = scalar_lea.sflag [#allocation3], 1
    %12 = vsyncpa %s11, 0
    %13 = vsyncpa [#allocation6], 0
    %14 = vsyncpa [#allocation4], 0
    %s15 = scalar_lea.sflag [#allocation4], 1
    %16 = vsyncpa %s15, 0
    loop: start=0, step=1, limit=4
    $region2: #{tpu_custom_call.1} parent=1 // loop_pre_header
      _
    $region3: #{tpu_custom_call.1} parent=1 // loop_header
      %s18 = sphi 0, %s22
      %p19 = scmp.ge.s32.totalorder %s18, 4
      %s28 = sphi 0, %s30
      %s31 = sphi 0, %s28
      %s32 = sphi 0, %s31
      %s48 = sphi 0, %s32
      %s52 = sphi 0, %s52
      %s54 = sphi 0, %s52
      %s55 = sphi 0, %s54
      %s69 = sphi 0, %s55
      %s73 = sphi 0, %s73
      %s75 = sphi 0, %s73
      %s76 = sphi 0, %s75
      %s90 = sphi 0, %s76
      %s94 = sphi 0, %s94
      %s96 = sphi 0, %s94
      %s97 = sphi 0, %s96
      %s111 = sphi 0, %s97
      %s115 = sphi 0, %s115
      %s117 = sphi 0, %s115
      %s118 = sphi 0, %s117
      %s132 = sphi 0, %s118
      %s138 = sphi 0, %s140
      %s141 = sphi 0, %s138
      %s142 = sphi 0, %s141
      %s158 = sphi 0, %s142
    $region4: #{tpu_custom_call.1} parent=1 // loop_header_branch
      %21 = sbr.rel (%p19) target = $region8
    $region5: #{tpu_custom_call.1} parent=1 // loop_body
      %s23 = ssub.s32 %s18, 1
      %s24 = ssub.s32 %s18, 2
      %s25 = sadd.s32 %s18, 1
      %s26 = ssub.s32 %s18, %s25
      %p27 = scmp.eq.s32.totalorder %s26, 0
      %s29 = sadd.s32 %s28, 1
      %s30 = scalar_select %p27, %s28, %s29
      %p33 = pneg %p27
      %p34 = scmp.eq.s32.totalorder %s18, 1
      %p35 = por %p33, %p34
      %p36 = scmp.ne.s32.totalorder %s28, %s31
      %p37 = scmp.eq.s32.totalorder %s18, 0
      %p38 = por %p36, %p37
      %p39 = scmp.ne.s32.totalorder %s28, %s31
      %p40 = scmp.eq.s32.totalorder %s23, 1
      %p41 = por %p39, %p40
      %p42 = scmp.ne.s32.totalorder %s31, %s32
      %p43 = scmp.eq.s32.totalorder %s23, 0
      %p44 = por %p42, %p43
      %p45 = scmp.ne.s32.totalorder %s31, %s32
      %p46 = scmp.eq.s32.totalorder %s24, 1
      %p47 = por %p45, %p46
      %p49 = scmp.ne.s32.totalorder %s32, %s48
      %p50 = scmp.eq.s32.totalorder %s24, 0
      %p51 = por %p49, %p50
      %s53 = sadd.s32 %s52, 1
      %p56 = scmp.eq.s32.totalorder %s18, 1
      %p57 = scmp.ne.s32.totalorder %s52, %s54
      %p58 = scmp.eq.s32.totalorder %s18, 0
      %p59 = por %p57, %p58
      %p60 = scmp.ne.s32.totalorder %s52, %s54
      %p61 = scmp.eq.s32.totalorder %s23, 1
      %p62 = por %p60, %p61
      %p63 = scmp.ne.s32.totalorder %s54, %s55
      %p64 = scmp.eq.s32.totalorder %s23, 0
      %p65 = por %p63, %p64
      %p66 = scmp.ne.s32.totalorder %s54, %s55
      %p67 = scmp.eq.s32.totalorder %s24, 1
      %p68 = por %p66, %p67
      %p70 = scmp.ne.s32.totalorder %s55, %s69
      %p71 = scmp.eq.s32.totalorder %s24, 0
      %p72 = por %p70, %p71
      %s74 = sadd.s32 %s73, 1
      %p77 = scmp.eq.s32.totalorder %s18, 1
      %p78 = scmp.ne.s32.totalorder %s73, %s75
      %p79 = scmp.eq.s32.totalorder %s18, 0
      %p80 = por %p78, %p79
      %p81 = scmp.ne.s32.totalorder %s73, %s75
      %p82 = scmp.eq.s32.totalorder %s23, 1
      %p83 = por %p81, %p82
      %p84 = scmp.ne.s32.totalorder %s75, %s76
      %p85 = scmp.eq.s32.totalorder %s23, 0
      %p86 = por %p84, %p85
      %p87 = scmp.ne.s32.totalorder %s75, %s76
      %p88 = scmp.eq.s32.totalorder %s24, 1
      %p89 = por %p87, %p88
      %p91 = scmp.ne.s32.totalorder %s76, %s90
      %p92 = scmp.eq.s32.totalorder %s24, 0
      %p93 = por %p91, %p92
      %s95 = sadd.s32 %s94, 1
      %p98 = scmp.eq.s32.totalorder %s18, 1
      %p99 = scmp.ne.s32.totalorder %s94, %s96
      %p100 = scmp.eq.s32.totalorder %s18, 0
      %p101 = por %p99, %p100
      %p102 = scmp.ne.s32.totalorder %s94, %s96
      %p103 = scmp.eq.s32.totalorder %s23, 1
      %p104 = por %p102, %p103
      %p105 = scmp.ne.s32.totalorder %s96, %s97
      %p106 = scmp.eq.s32.totalorder %s23, 0
      %p107 = por %p105, %p106
      %p108 = scmp.ne.s32.totalorder %s96, %s97
      %p109 = scmp.eq.s32.totalorder %s24, 1
      %p110 = por %p108, %p109
      %p112 = scmp.ne.s32.totalorder %s97, %s111
      %p113 = scmp.eq.s32.totalorder %s24, 0
      %p114 = por %p112, %p113
      %s116 = sadd.s32 %s115, 1
      %p119 = scmp.eq.s32.totalorder %s18, 1
      %p120 = scmp.ne.s32.totalorder %s115, %s117
      %p121 = scmp.eq.s32.totalorder %s18, 0
      %p122 = por %p120, %p121
      %p123 = scmp.ne.s32.totalorder %s115, %s117
      %p124 = scmp.eq.s32.totalorder %s23, 1
      %p125 = por %p123, %p124
      %p126 = scmp.ne.s32.totalorder %s117, %s118
      %p127 = scmp.eq.s32.totalorder %s23, 0
      %p128 = por %p126, %p127
      %p129 = scmp.ne.s32.totalorder %s117, %s118
      %p130 = scmp.eq.s32.totalorder %s24, 1
      %p131 = por %p129, %p130
      %p133 = scmp.ne.s32.totalorder %s118, %s132
      %p134 = scmp.eq.s32.totalorder %s24, 0
      %p135 = por %p133, %p134
      %s136 = ssub.s32 %s18, %s25
      %p137 = scmp.eq.s32.totalorder %s136, 0
      %s139 = sadd.s32 %s138, 1
      %s140 = scalar_select %p137, %s138, %s139
      %p143 = pneg %p137
      %p144 = scmp.eq.s32.totalorder %s18, 1
      %p145 = por %p143, %p144
      %p146 = scmp.ne.s32.totalorder %s138, %s141
      %p147 = scmp.eq.s32.totalorder %s18, 0
      %p148 = por %p146, %p147
      %p149 = scmp.ne.s32.totalorder %s138, %s141
      %p150 = scmp.eq.s32.totalorder %s23, 1
      %p151 = por %p149, %p150
      %p152 = scmp.ne.s32.totalorder %s141, %s142
      %p153 = scmp.eq.s32.totalorder %s23, 0
      %p154 = por %p152, %p153
      %p155 = scmp.ne.s32.totalorder %s141, %s142
      %p156 = scmp.eq.s32.totalorder %s24, 1
      %p157 = por %p155, %p156
      %p159 = scmp.ne.s32.totalorder %s142, %s158
      %p160 = scmp.eq.s32.totalorder %s24, 0
      %p161 = por %p159, %p160
      %p162 = scmp.le.s32.totalorder 1, %s18
      %p163 = scmp.lt.s32.totalorder %s18, 3
      %p164 = pnand %p162, %p163
      %p165 = pneg %p164
      // Predicated region
      $region9: #{tpu_custom_call.1} parent=5 // pred_check
        _
      $region10: #{tpu_custom_call.1} parent=5 // pred_check_branch
        %167 = sbr.rel (%p164) target = $region12
      $region11: #{tpu_custom_call.1} parent=5 // pred_region
        %s168 = ssub.s32 %s18, 1
        // Predicated region
        $region13: #{tpu_custom_call.1} parent=11 // pred_check
          %p169 = pneg %p65
        $region14: #{tpu_custom_call.1} parent=11 // pred_check_branch
          %171 = sbr.rel (%p169) target = $region16
        $region15: #{tpu_custom_call.1} parent=11 // pred_region
          %173 = vsyncadd [#allocation6], 0
          %s174 = sshll.u32 %s1, 4
          %s175 = int_to_ptr.hbm [resolvable:$true] %s174
          %s176 = sshll.u32 [#allocation5], 4
          %s177 = int_to_ptr.vmem [resolvable:$true] %s176
          %182 = dma.hbm_to_vmem [thread:$0]  %s175, 2048, %s177, [#allocation6], 128, 128, 8
        $region16: #{tpu_custom_call.1} parent=11 // pred_fallthru
          _
        // Predicated region
        $region17: #{tpu_custom_call.1} parent=11 // pred_check
          %p183 = pneg %p86
        $region18: #{tpu_custom_call.1} parent=11 // pred_check_branch
          %185 = sbr.rel (%p183) target = $region20
        $region19: #{tpu_custom_call.1} parent=11 // pred_region
          _
        $region20: #{tpu_custom_call.1} parent=11 // pred_fallthru
          _
        // Predicated region
        $region21: #{tpu_custom_call.1} parent=11 // pred_check
          %p186 = pneg %p107
        $region22: #{tpu_custom_call.1} parent=11 // pred_check_branch
          %188 = sbr.rel (%p186) target = $region24
        $region23: #{tpu_custom_call.1} parent=11 // pred_region
          %190 = vsyncadd [#allocation6], 0
          %s191 = sshll.u32 %s3, 4
          %s192 = int_to_ptr.hbm [resolvable:$true] %s191
          %s193 = sshll.u32 [#allocation7], 4
          %s194 = int_to_ptr.vmem [resolvable:$true] %s193
          %199 = dma.hbm_to_vmem [thread:$0]  %s192, 2048, %s194, [#allocation6], 128, 128, 8
        $region24: #{tpu_custom_call.1} parent=11 // pred_fallthru
          _
        // Predicated region
        $region25: #{tpu_custom_call.1} parent=11 // pred_check
          %p200 = pneg %p128
        $region26: #{tpu_custom_call.1} parent=11 // pred_check_branch
          %202 = sbr.rel (%p200) target = $region28
        $region27: #{tpu_custom_call.1} parent=11 // pred_region
          _
        $region28: #{tpu_custom_call.1} parent=11 // pred_fallthru
          _
      $region12: #{tpu_custom_call.1} parent=5 // pred_fallthru
        _
      %p203 = scmp.lt.s32.totalorder %s18, 2
      // Predicated region
      $region29: #{tpu_custom_call.1} parent=5 // pred_check
        %p204 = pneg %p203
      $region30: #{tpu_custom_call.1} parent=5 // pred_check_branch
        %206 = sbr.rel (%p204) target = $region32
      $region31: #{tpu_custom_call.1} parent=5 // pred_region
        // Predicated region
        $region33: #{tpu_custom_call.1} parent=31 // pred_check
          %p207 = pneg %p38
        $region34: #{tpu_custom_call.1} parent=31 // pred_check_branch
          %209 = sbr.rel (%p207) target = $region36
        $region35: #{tpu_custom_call.1} parent=31 // pred_region
          %s210 = sand.u32 %s28, 1
          %s211 = scalar_lea.sflag [#allocation3], %s210
          %s212 = sand.u32 %s28, 1
          %s213 = smul.addr %s212, 32
          %s214 = scalar_lea.vmem [#allocation2], %s213
          %216 = vsyncadd %s211, 0
          %s217 = smul.addr %s18, 8
          %s218 = scalar_lea.hbm %s0, %s217
          %s219 = sshll.u32 %s218, 4
          %s220 = int_to_ptr.hbm [resolvable:$true] %s219
          %s221 = sshll.u32 %s214, 4
          %s222 = int_to_ptr.vmem [resolvable:$true] %s221
          %227 = dma.hbm_to_vmem [thread:$0]  %s220, 512, %s222, %s211, 256, 128, 8
        $region36: #{tpu_custom_call.1} parent=31 // pred_fallthru
          _
      $region32: #{tpu_custom_call.1} parent=5 // pred_fallthru
        _
      %p228 = scmp.le.s32.totalorder 1, %s18
      %p229 = scmp.lt.s32.totalorder %s18, 3
      %p230 = pnand %p228, %p229
      %p231 = pneg %p230
      // Predicated region
      $region37: #{tpu_custom_call.1} parent=5 // pred_check
        _
      $region38: #{tpu_custom_call.1} parent=5 // pred_check_branch
        %233 = sbr.rel (%p230) target = $region40
      $region39: #{tpu_custom_call.1} parent=5 // pred_region
        %s234 = ssub.s32 %s18, 1
        %s235 = sand.u32 %s31, 1
        %s236 = scalar_lea.sflag [#allocation3], %s235
        %s237 = sand.u32 %s31, 1
        %s238 = smul.addr %s237, 32
        %s239 = scalar_lea.vmem [#allocation2], %s238
        // Predicated region
        $region41: #{tpu_custom_call.1} parent=39 // pred_check
          %p240 = pneg %p44
        $region42: #{tpu_custom_call.1} parent=39 // pred_check_branch
          %242 = sbr.rel (%p240) target = $region44
        $region43: #{tpu_custom_call.1} parent=39 // pred_region
          %244 = dma.done %s236, 512
        $region44: #{tpu_custom_call.1} parent=39 // pred_fallthru
          _
        // Predicated region
        $region45: #{tpu_custom_call.1} parent=39 // pred_check
          %p245 = pneg %p65
        $region46: #{tpu_custom_call.1} parent=39 // pred_check_branch
          %247 = sbr.rel (%p245) target = $region48
        $region47: #{tpu_custom_call.1} parent=39 // pred_region
          %249 = dma.done [#allocation6], 2048
        $region48: #{tpu_custom_call.1} parent=39 // pred_fallthru
          _
        // Predicated region
        $region49: #{tpu_custom_call.1} parent=39 // pred_check
          %p250 = pneg %p107
        $region50: #{tpu_custom_call.1} parent=39 // pred_check_branch
          %252 = sbr.rel (%p250) target = $region52
        $region51: #{tpu_custom_call.1} parent=39 // pred_region
          %254 = dma.done [#allocation6], 2048
        $region52: #{tpu_custom_call.1} parent=39 // pred_fallthru
          _
        %s255 = sand.u32 %s31, 1
        %s256 = scalar_lea.sflag [#allocation3], %s255
        %s257 = sand.u32 %s31, 1
        %s258 = smul.addr %s257, 32
        %s259 = scalar_lea.vmem [#allocation2], %s258
        %p260 = pneg %p44
        %p261 = pneg %p41
        %p262 = pneg %p65
        %p263 = pneg %p62
        %p264 = pneg %p86
        %p265 = pneg %p83
        %p266 = pneg %p107
        %p267 = pneg %p104
        %p268 = pneg %p128
        %p269 = pneg %p125
        %p270 = pneg %p154
        %p271 = pneg %p151
        %s272 = sand.u32 %s141, 1
        %s273 = scalar_lea.sflag [#allocation4], %s272
        %s274 = sand.u32 %s141, 1
        %s275 = smul.addr %s274, 8
        %s276 = scalar_lea.vmem [#allocation8], %s275
        %v277 = vld [vmem:[%s239] sm:$0xff]
        %v278 = vld [vmem:[%s239 + $0x8] sm:$0xff]
        %v279 = vld [vmem:[%s239 + $0x10] sm:$0xff]
        %v280 = vld [vmem:[%s239 + $0x18] sm:$0xff]
        %v281 = vld [vmem:[#allocation5] sm:$0xff]
        %v282 = vld [vmem:[#allocation5 + $0x8] sm:$0xff]
        %v283 = vld [vmem:[#allocation5 + $0x10] sm:$0xff]
        %v284 = vld [vmem:[#allocation5 + $0x18] sm:$0xff]
        %v285 = vld [vmem:[#allocation5 + $0x20] sm:$0xff]
        %v286 = vld [vmem:[#allocation5 + $0x28] sm:$0xff]
        %v287 = vld [vmem:[#allocation5 + $0x30] sm:$0xff]
        %v288 = vld [vmem:[#allocation5 + $0x38] sm:$0xff]
        %v289 = vld [vmem:[#allocation5 + $0x40] sm:$0xff]
        %v290 = vld [vmem:[#allocation5 + $0x48] sm:$0xff]
        %v291 = vld [vmem:[#allocation5 + $0x50] sm:$0xff]
        %v292 = vld [vmem:[#allocation5 + $0x58] sm:$0xff]
        %v293 = vld [vmem:[#allocation5 + $0x60] sm:$0xff]
        %v294 = vld [vmem:[#allocation5 + $0x68] sm:$0xff]
        %v295 = vld [vmem:[#allocation5 + $0x70] sm:$0xff]
        %v296 = vld [vmem:[#allocation5 + $0x78] sm:$0xff]
        %v297 = vld [vmem:[#allocation7] sm:$0xff]
        %v298 = vld [vmem:[#allocation7 + $0x8] sm:$0xff]
        %v299 = vld [vmem:[#allocation7 + $0x10] sm:$0xff]
        %v300 = vld [vmem:[#allocation7 + $0x18] sm:$0xff]
        %v301 = vld [vmem:[#allocation7 + $0x20] sm:$0xff]
        %v302 = vld [vmem:[#allocation7 + $0x28] sm:$0xff]
        %v303 = vld [vmem:[#allocation7 + $0x30] sm:$0xff]
        %v304 = vld [vmem:[#allocation7 + $0x38] sm:$0xff]
        %v305 = vld [vmem:[#allocation7 + $0x40] sm:$0xff]
        %v306 = vld [vmem:[#allocation7 + $0x48] sm:$0xff]
        %v307 = vld [vmem:[#allocation7 + $0x50] sm:$0xff]
        %v308 = vld [vmem:[#allocation7 + $0x58] sm:$0xff]
        %v309 = vld [vmem:[#allocation7 + $0x60] sm:$0xff]
        %v310 = vld [vmem:[#allocation7 + $0x68] sm:$0xff]
        %v311 = vld [vmem:[#allocation7 + $0x70] sm:$0xff]
        %v312 = vld [vmem:[#allocation7 + $0x78] sm:$0xff]
        %v313 = vld [vmem:[%s2] sm:$0x1]
        %v315 = vperm.slane %v313, 0
        %317 = vmatpush.msra.mxu0 %v296
        %318 = vmatpush.msra.mxu0 %v295
        %319 = vmatpush.msra.mxu0 %v294
        %320 = vmatpush.msra.mxu0 %v293
        %321 = vmatpush.msra.mxu0 %v292
        %322 = vmatpush.msra.mxu0 %v291
        %323 = vmatpush.msra.mxu0 %v290
        %324 = vmatpush.msra.mxu0 %v289
        %325 = vmatpush.msra.mxu0 %v288
        %326 = vmatpush.msra.mxu0 %v287
        %327 = vmatpush.msra.mxu0 %v286
        %328 = vmatpush.msra.mxu0 %v285
        %329 = vmatpush.msra.mxu0 %v284
        %330 = vmatpush.msra.mxu0 %v283
        %331 = vmatpush.msra.mxu0 %v282
        %332 = vmatpush.msra.mxu0 %v281
        %333 = vmatmul.f32.gmra.mxu0 %v277
        %v334 = vpop.f32.mrf.mxu0
        %v335 = vadd.f32 %v315, %v334
        %336 = vmatmul.f32.gmra.mxu0 %v278
        %v337 = vpop.f32.mrf.mxu0
        %v338 = vadd.f32 %v315, %v337
        %339 = vmatmul.f32.gmra.mxu0 %v279
        %v340 = vpop.f32.mrf.mxu0
        %v341 = vadd.f32 %v315, %v340
        %342 = vmatmul.f32.gmra.mxu0 %v280
        %v343 = vpop.f32.mrf.mxu0
        %v344 = vadd.f32 %v315, %v343
        %345 = vdwg.mxu0
        %v346 = vmax.f32 %v335, 0.0
        %v347 = vmax.f32 %v338, 0.0
        %v348 = vmax.f32 %v341, 0.0
        %v349 = vmax.f32 %v344, 0.0
        %v350 = vld [vmem:[%s4] sm:$0x1]
        %v352 = vperm.slane %v350, 0
        %354 = vmatpush.msra.mxu0 %v312
        %355 = vmatpush.msra.mxu0 %v311
        %356 = vmatpush.msra.mxu0 %v310
        %357 = vmatpush.msra.mxu0 %v309
        %358 = vmatpush.msra.mxu0 %v308
        %359 = vmatpush.msra.mxu0 %v307
        %360 = vmatpush.msra.mxu0 %v306
        %361 = vmatpush.msra.mxu0 %v305
        %362 = vmatpush.msra.mxu0 %v304
        %363 = vmatpush.msra.mxu0 %v303
        %364 = vmatpush.msra.mxu0 %v302
        %365 = vmatpush.msra.mxu0 %v301
        %366 = vmatpush.msra.mxu0 %v300
        %367 = vmatpush.msra.mxu0 %v299
        %368 = vmatpush.msra.mxu0 %v298
        %369 = vmatpush.msra.mxu0 %v297
        %370 = vmatmul.f32.gmra.mxu0 %v346
        %v371 = vpop.f32.mrf.mxu0
        %v372 = vadd.f32 %v352, %v371
        %373 = vmatmul.f32.gmra.mxu0 %v347
        %v374 = vpop.f32.mrf.mxu0
        %v375 = vadd.f32 %v352, %v374
        %376 = vmatmul.f32.gmra.mxu0 %v348
        %v377 = vpop.f32.mrf.mxu0
        %v378 = vadd.f32 %v352, %v377
        %379 = vmatmul.f32.gmra.mxu0 %v349
        %v380 = vpop.f32.mrf.mxu0
        %v381 = vadd.f32 %v352, %v380
        %382 = vdwg.mxu0
        %v383 = vmax.f32 %v372, %v375
        %v384 = vmax.f32 %v378, %v381
        %v385 = vmax.f32 %v383, %v384
        %v386 = vsub.f32 %v372, %v385
        %v387 = vsub.f32 %v375, %v385
        %v388 = vsub.f32 %v378, %v385
        %v389 = vsub.f32 %v381, %v385
        %v390 = vmul.f32 %v386, 1.442695
        %v391 = vpow.pop %v390
        %v392 = vmul.f32 %v387, 1.442695
        %v393 = vpow.pop %v392
        %v394 = vmul.f32 %v388, 1.442695
        %v395 = vpow.pop %v394
        %v396 = vmul.f32 %v389, 1.442695
        %v397 = vpow.pop %v396
        %v398 = vmul.f32 %v391, %v277
        %v399 = vmul.f32 %v393, %v278
        %v400 = vmul.f32 %v395, %v279
        %v401 = vmul.f32 %v397, %v280
        %v402 = vadd.f32 %v398, %v399
        %v403 = vadd.f32 %v402, %v400
        %v404 = vadd.f32 %v403, %v401
        %v405 = vadd.f32 %v391, %v393
        %v406 = vadd.f32 %v405, %v395
        %v407 = vadd.f32 %v406, %v397
        %v408 = vrcp.pop %v407
        %v409 = vmul.f32 %v407, %v408
        %v410 = vsub.f32 1.0, %v409
        %v411 = vmul.f32 %v408, %v410
        %v412 = vadd.f32 %v408, %v411
        %vm413 = vweird.f32 %v407
        %vm414 = vweird.f32 %v408
        %vm415 = vmor %vm413, %vm414
        %v416 = vsel %vm415, %v408, %v412
        %v417 = vand.u32 2147483647, %v407
        %vm418 = vcmp.eq.f32.partialorder %v417, 8.507059e+37
        %v419 = vand.u32 %v407, 2147483648
        %v420 = vor.u32 1.1754944e-38, %v419
        %v421 = vsel %vm418, %v420, %v416
        %v422 = vmul.f32 %v404, %v421
        %423 = vst [vmem:[%s276] sm:$0xff] %v422
        %s424 = sand.u32 %s141, 1
        %s425 = scalar_lea.sflag [#allocation4], %s424
        %s426 = sand.u32 %s141, 1
        %s427 = smul.addr %s426, 8
        %s428 = scalar_lea.vmem [#allocation8], %s427
        // Predicated region
        $region53: #{tpu_custom_call.1} parent=39 // pred_check
          %p429 = pneg %p151
        $region54: #{tpu_custom_call.1} parent=39 // pred_check_branch
          %431 = sbr.rel (%p429) target = $region56
        $region55: #{tpu_custom_call.1} parent=39 // pred_region
          %433 = vsyncadd %s425, 0
          %s434 = smul.addr %s23, 8
          %s435 = scalar_lea.hbm %s5, %s434
          %s437 = sshll.u32 %s428, 4
          %s438 = int_to_ptr.vmem [resolvable:$true] %s437
          %s439 = sshll.u32 %s435, 4
          %s440 = int_to_ptr.hbm [resolvable:$true] %s439
          %442 = dma.vmem_to_hbm [thread:$0]  %s438, 128, %s440, %s425
        $region56: #{tpu_custom_call.1} parent=39 // pred_fallthru
          _
      $region40: #{tpu_custom_call.1} parent=5 // pred_fallthru
        _
      %p443 = scmp.le.s32.totalorder 2, %s18
      // Predicated region
      $region57: #{tpu_custom_call.1} parent=5 // pred_check
        %p444 = pneg %p443
      $region58: #{tpu_custom_call.1} parent=5 // pred_check_branch
        %446 = sbr.rel (%p444) target = $region60
      $region59: #{tpu_custom_call.1} parent=5 // pred_region
        %s447 = ssub.s32 %s18, 2
        // Predicated region
        $region61: #{tpu_custom_call.1} parent=59 // pred_check
          %p448 = pneg %p157
        $region62: #{tpu_custom_call.1} parent=59 // pred_check_branch
          %450 = sbr.rel (%p448) target = $region64
        $region63: #{tpu_custom_call.1} parent=59 // pred_region
          %s451 = sand.u32 %s142, 1
          %s452 = scalar_lea.sflag [#allocation4], %s451
          %s453 = sand.u32 %s142, 1
          %s454 = smul.addr %s453, 8
          %s455 = scalar_lea.vmem [#allocation8], %s454
          %457 = dma.done %s452, 128
        $region64: #{tpu_custom_call.1} parent=59 // pred_fallthru
          _
      $region60: #{tpu_custom_call.1} parent=5 // pred_fallthru
        _
    $region6: #{tpu_custom_call.1} parent=1 // loop_footer
      %s22 = sadd.s32 1, %s18
    $region7: #{tpu_custom_call.1} parent=1 // loop_footer_branch
      %17 = sbr.rel target = $region3
    $region8: #{tpu_custom_call.1} parent=1 // loop_exit
      _
    %458 = vsyncpa [#allocation3], 1
    %s459 = scalar_lea.sflag [#allocation3], 1
    %460 = vsyncpa %s459, 1
    %461 = vsyncpa [#allocation6], 1
    %462 = vsyncpa [#allocation4], 1
    %s463 = scalar_lea.sflag [#allocation4], 1
    %464 = vsyncpa %s463, 1

</llo_original>
